<compile_context>
chip_gen: v7x
topology: tpu7x:2x2x1
jax: 0.10.0
libtpu: 0.0.40
codegen_flags: <defaults>
</compile_context>

<pallas_src>
import jax
import jax.numpy as jnp
from jax.experimental import pallas as pl
from jax.experimental.pallas import tpu as pltpu

_LANES = 128


def _cdiv(a, b):
    return -(-a // b)


# ---------------------------------------------------------------------------
# Kernel factory: streaming sum of squared error and/or BCE-with-logits terms
# ---------------------------------------------------------------------------
def _make_sums_kernel(tm, inner_blocks, mode, full_valid_rows, rem_lanes,
                      any_masked, acc_rows):
    do_mse = mode in ("mse", "both")
    do_bce = mode in ("bce", "both")

    def kernel(*args):
        k = 0
        if do_mse:
            prr_ref, lrr_ref = args[k], args[k + 1]
            k += 2
        if do_bce:
            prm_ref, lrm_ref = args[k], args[k + 1]
            k += 2
        if do_mse:
            sse_out = args[k]
            k += 1
        if do_bce:
            bce_out = args[k]
            k += 1
        if do_mse:
            sse_acc = args[k]
            k += 1
        if do_bce:
            bce_acc = args[k]
            k += 1

        c = pl.program_id(0)      # parallel split (megacore sharding on v7x)
        i = pl.program_id(1)      # reduction axis

        @pl.when(i == 0)
        def _init():
            if do_mse:
                sse_acc[...] = jnp.zeros_like(sse_acc)
            if do_bce:
                bce_acc[...] = jnp.zeros_like(bce_acc)

        sq = None
        bce = None
        if do_mse:
            diff = (prr_ref[...].astype(jnp.float32)
                    - lrr_ref[...].astype(jnp.float32))
            sq = diff * diff
        if do_bce:
            # numerically stable BCE-with-logits: max(x,0) - x*y + log1p(exp(-|x|))
            x = prm_ref[...].astype(jnp.float32)
            y = lrm_ref[...].astype(jnp.float32)
            bce = (jnp.maximum(x, 0.0) - x * y
                   + jnp.log1p(jnp.exp(-jnp.abs(x))))

        def _fold(v):
            # Fold the (tm, 128) block into the (acc_rows, 128) accumulator
            # shape with pure VPU adds (no cross-lane work per step).
            if tm > acc_rows:
                return jnp.sum(v.reshape(tm // acc_rows, acc_rows, _LANES),
                               axis=0)
            return v

        def _accumulate(sq_v, bce_v):
            if do_mse:
                sse_acc[...] = sse_acc[...] + _fold(sq_v)
            if do_bce:
                bce_acc[...] = bce_acc[...] + _fold(bce_v)

        if any_masked:
            block_row0 = (c * inner_blocks + i) * tm
            touches_pad = block_row0 + tm > full_valid_rows

            @pl.when(jnp.logical_not(touches_pad))
            def _fast():
                _accumulate(sq, bce)

            @pl.when(touches_pad)
            def _masked():
                row_idx = jax.lax.broadcasted_iota(jnp.int32, (tm, _LANES), 0)
                lane_idx = jax.lax.broadcasted_iota(jnp.int32, (tm, _LANES), 1)
                grow = block_row0 + row_idx
                valid = grow < full_valid_rows
                if rem_lanes:
                    valid = jnp.logical_or(
                        valid,
                        jnp.logical_and(grow == full_valid_rows,
                                        lane_idx < rem_lanes))
                # jnp.where (select), NOT multiply-by-mask, so Inf/NaN garbage
                # in over-covered block regions cannot leak into the sums.
                sq_m = jnp.where(valid, sq, 0.0) if do_mse else None
                bce_m = jnp.where(valid, bce, 0.0) if do_bce else None
                _accumulate(sq_m, bce_m)
        else:
            _accumulate(sq, bce)

        @pl.when(i == pl.num_programs(1) - 1)
        def _finalize():
            if do_mse:
                sse_out[...] = jnp.sum(sse_acc[...]) + jnp.zeros_like(sse_out)
            if do_bce:
                bce_out[...] = jnp.sum(bce_acc[...]) + jnp.zeros_like(bce_out)

    return kernel


# ---------------------------------------------------------------------------
# Wrapper: fused single-pass streaming reduction over flattened tensors
# ---------------------------------------------------------------------------
def _streaming_sums(arrays, mode, *, tile_rows=4096, num_splits=2):
    """One fused HBM-bound pass.

    arrays: (p_reg, l_reg)                  for mode="mse"
            (p_clsf, l_clsf)                for mode="bce"
            (p_reg, l_reg, p_clsf, l_clsf)  for mode="both"
    Returns a tuple of f32 scalar sums: (sse,), (bce,) or (sse, bce).
    """
    n = int(arrays[0].size)
    rows = _cdiv(n, _LANES)
    padded_n = rows * _LANES

    def flat(a):
        a = a.reshape(-1)                 # free (contiguous) reshape
        if padded_n != n:
            # TODO(synk): this minimal pad-to-128-lanes still copies the
            # tensor; it only triggers when numel % 128 != 0.
            a = jnp.pad(a, (0, padded_n - n))
        return a.reshape(rows, _LANES)    # native dtype, no astype here

    flats = [flat(a) for a in arrays]

    # Row tile: largest multiple of 8 <= min(tile_rows, rows); full-dim if tiny.
    if rows <= 8:
        tm = rows
    else:
        tm = min(tile_rows, (rows // 8) * 8)
    blocks_total = _cdiv(rows, tm)
    if blocks_total < 2:
        num_splits = 1
    inner_blocks = _cdiv(blocks_total, num_splits)

    full_valid_rows = n // _LANES         # rows with all 128 lanes valid
    rem_lanes = n % _LANES                # valid lanes in the last partial row
    total_cover_rows = num_splits * inner_blocks * tm
    any_masked = total_cover_rows > full_valid_rows
    needs_clamp = num_splits * inner_blocks > blocks_total
    acc_rows = 8 if tm % 8 == 0 else tm

    if needs_clamp:
        # Over-cover blocks re-read the last valid block; the in-kernel mask
        # (computed from the *nominal* block index) zeroes their contribution.
        def in_index(c, i):
            return (jnp.minimum(c * inner_blocks + i, blocks_total - 1), 0)
    else:
        def in_index(c, i):
            return (c * inner_blocks + i, 0)

    in_spec = pl.BlockSpec((tm, _LANES), in_index)
    out_spec = pl.BlockSpec((1, 1), lambda c, i: (c, 0))

    n_out = 2 if mode == "both" else 1
    kernel = _make_sums_kernel(tm, inner_blocks, mode, full_valid_rows,
                               rem_lanes, any_masked, acc_rows)

    outs = pl.pallas_call(
        kernel,
        out_shape=tuple(jax.ShapeDtypeStruct((num_splits, 1), jnp.float32)
                        for _ in range(n_out)),
        grid_spec=pltpu.PrefetchScalarGridSpec(
            num_scalar_prefetch=0,
            grid=(num_splits, inner_blocks),
            in_specs=[in_spec] * len(flats),
            out_specs=tuple(out_spec for _ in range(n_out)),
            scratch_shapes=[pltpu.VMEM((acc_rows, _LANES), jnp.float32)
                            for _ in range(n_out)],
        ),
        compiler_params=pltpu.CompilerParams(
            # TODO(synk): on v7x verify (xprof) that this leading axis shards
            # across both TensorCores; switch to pltpu.CORE_PARALLEL if not.
            dimension_semantics=("parallel", "arbitrary"),
            vmem_limit_bytes=40 * 1024 * 1024,
        ),
    )(*flats)

    # Combine the per-split partial sums on the host (num_splits scalars).
    return tuple(jnp.sum(o) for o in outs)


# ---------------------------------------------------------------------------
# MTLLoss_RM equivalent (epoch scheduling + loss weighting, host-side)
# ---------------------------------------------------------------------------
class MTLLossRM:
    def __init__(self, strategy, loss_weight):
        self.strategy = strategy
        self.loss_weight = loss_weight

    def _in(self, epoch, key):
        return (epoch >= self.strategy[key + "_start"]
                and epoch < self.strategy[key + "_end"])

    def forward(self, p_rainrate, p_rainmask, l_rainrate, l_rainmask, epoch):
        # Epoch-specialized kernels: non-mix epochs only stream the two
        # tensors they actually need (kernel is HBM-bandwidth-bound).
        if self._in(epoch, "rainrate"):
            (sse,) = _streaming_sums((p_rainrate, l_rainrate), "mse")
            return sse / p_rainrate.size              # MSELoss(mean)
        elif self._in(epoch, "rainmask"):
            (bce_sum,) = _streaming_sums((p_rainmask, l_rainmask), "bce")
            return bce_sum / p_rainmask.size          # BCEWithLogitsLoss(mean)
        elif self._in(epoch, "mix"):
            sse, bce_sum = _streaming_sums(
                (p_rainrate, l_rainrate, p_rainmask, l_rainmask), "both")
            mse = sse / p_rainrate.size
            bce = bce_sum / p_rainmask.size
            return self.loss_weight[0] * mse + self.loss_weight[1] * bce
        else:
            # TODO(synk): weighted_mix/wes/cloudwater/cloudice epochs are
            # undefined in MTLLoss_RM.forward, matching the PyTorch module.
            raise RuntimeError("undefined epoch num!")

    __call__ = forward


# ---------------------------------------------------------------------------
# Pure-JAX reference for correctness check
# ---------------------------------------------------------------------------
def _ref_forward(mod, prr, prm, lrr, lrm, epoch):
    mse = jnp.mean((prr.astype(jnp.float32) - lrr.astype(jnp.float32)) ** 2)
    x, y = prm.astype(jnp.float32), lrm.astype(jnp.float32)
    bce = jnp.mean(jnp.maximum(x, 0.0) - x * y + jnp.log1p(jnp.exp(-jnp.abs(x))))
    if mod._in(epoch, "rainrate"):
        return mse
    elif mod._in(epoch, "rainmask"):
        return bce
    else:
        return mod.loss_weight[0] * mse + mod.loss_weight[1] * bce


if __name__ == "__main__":
    key = jax.random.PRNGKey(0)
    strategy = {
        "rainrate_start": 0, "rainrate_end": 5,
        "rainmask_start": 5, "rainmask_end": 10,
        "mix_start": 10, "mix_end": 20,
        "weighted_mix_start": 20, "weighted_mix_end": 25,
        "wes_start": 25, "wes_end": 30,
        "cloudwater_start": 30, "cloudwater_end": 35,
        "cloudice_start": 35, "cloudice_end": 40,
    }
    loss_weight = (0.7, 0.3)
    mod = MTLLossRM(strategy, loss_weight)

    ok = True

    # (shape, epochs): first is exact lane coverage; second exercises the
    # lane-padded tail + mask path.  Epochs hit mse / bce / mix kernels.
    cases = [((2, 4, 16, 16), (2, 7, 12)),
             ((1, 3, 5, 7), (2, 7, 12))]
    for shape, epochs in cases:
        k1, k2, k3, k4, key = jax.random.split(key, 5)
        p_rainrate = jax.random.normal(k1, shape, dtype=jnp.float32)
        l_rainrate = jax.random.normal(k2, shape, dtype=jnp.float32)
        p_rainmask = jax.random.normal(k3, shape, dtype=jnp.float32)   # logits
        l_rainmask = jax.random.bernoulli(k4, 0.3, shape).astype(jnp.float32)
        for epoch in epochs:
            out = mod.forward(p_rainrate, p_rainmask, l_rainrate, l_rainmask,
                              epoch)
            out = jax.block_until_ready(out)
            ref = _ref_forward(mod, p_rainrate, p_rainmask,
                               l_rainrate, l_rainmask, epoch)
            if not jnp.allclose(out, ref, rtol=1e-5, atol=1e-5):
                ok = False

    # Extra coverage of the multi-block / split / partial-trailing-block /
    # clamped over-cover paths (tiny tile so small tensors span many blocks).
    extra_shapes = [(2, 3, 24, 40),   # rows=45: 6 blocks @ tm=8, partial tail
                    (2, 4, 24, 24)]   # rows=36: 5 blocks @ tm=8 -> clamp path
    for shape in extra_shapes:
        k1, k2, k3, k4, key = jax.random.split(key, 5)
        prr = jax.random.normal(k1, shape, dtype=jnp.float32)
        lrr = jax.random.normal(k2, shape, dtype=jnp.float32)
        prm = jax.random.normal(k3, shape, dtype=jnp.float32)
        lrm = jax.random.bernoulli(k4, 0.3, shape).astype(jnp.float32)
        sse, bce = _streaming_sums((prr, lrr, prm, lrm), "both", tile_rows=8)
        sse = jax.block_until_ready(sse)
        ref_sse = jnp.sum((prr - lrr) ** 2)
        ref_bce = jnp.sum(jnp.maximum(prm, 0.0) - prm * lrm
                          + jnp.log1p(jnp.exp(-jnp.abs(prm))))
        if not (jnp.allclose(sse, ref_sse, rtol=1e-5, atol=1e-3)
                and jnp.allclose(bce, ref_bce, rtol=1e-5, atol=1e-3)):
            ok = False

    if ok:
        print("KERNEL_OK")
</pallas_src>

<mosaic_0001>
module attributes {stable_mosaic.version = 11 : i64} {
  func.func @kernel(%arg0: i32, %arg1: i32, %arg2: memref<16x128xf32, #tpu.memory_space<vmem>>, %arg3: memref<16x128xf32, #tpu.memory_space<vmem>>, %arg4: memref<1x1xf32, #tpu.memory_space<vmem>>, %arg5: memref<8x128xf32, #tpu.memory_space<vmem>>) attributes {dimension_semantics = [#tpu.dimension_semantics<parallel>, #tpu.dimension_semantics<arbitrary>], iteration_bounds = array<i64: 1, 1>, scalar_prefetch = 0 : i64, scratch_operands = 1 : i64, tpu.core_type = #tpu.core_type<tc>, window_params = [{transform_indices = @transform_0, window_bounds = array<i64: 16, 128>}, {transform_indices = @transform_1, window_bounds = array<i64: 16, 128>}, {transform_indices = @transform_2, window_bounds = array<i64: 1, 1>}]} {
    %c0_i32 = arith.constant 0 : i32
    %0 = arith.cmpi eq, %arg1, %c0_i32 : i32
    %1 = arith.extui %0 : i1 to i32
    %c0_i32_0 = arith.constant 0 : i32
    %2 = arith.cmpi ne, %1, %c0_i32_0 : i32
    scf.if %2 {
      %cst_10 = arith.constant 0.000000e+00 : f32
      %15 = vector.broadcast %cst_10 : f32 to vector<8x128xf32>
      %c0_11 = arith.constant 0 : index
      %c0_12 = arith.constant 0 : index
      %16 = vector.load %arg5[%c0_11, %c0_12] : memref<8x128xf32, #tpu.memory_space<vmem>>, vector<8x128xf32>
      tpu.vector_store %arg5[%c0_11, %c0_12], %15 {strides = array<i32>} : memref<8x128xf32, #tpu.memory_space<vmem>>, vector<8x128xf32>,
    } else {
    }
    %c0 = arith.constant 0 : index
    %c0_1 = arith.constant 0 : index
    %3 = vector.load %arg2[%c0, %c0_1] : memref<16x128xf32, #tpu.memory_space<vmem>>, vector<16x128xf32>
    %c0_2 = arith.constant 0 : index
    %c0_3 = arith.constant 0 : index
    %4 = vector.load %arg3[%c0_2, %c0_3] : memref<16x128xf32, #tpu.memory_space<vmem>>, vector<16x128xf32>
    %5 = arith.subf %3, %4 : vector<16x128xf32>
    %6 = arith.mulf %5, %5 : vector<16x128xf32>
    %c0_4 = arith.constant 0 : index
    %c0_5 = arith.constant 0 : index
    %7 = vector.load %arg5[%c0_4, %c0_5] : memref<8x128xf32, #tpu.memory_space<vmem>>, vector<8x128xf32>
    %8 = vector.shape_cast %6 : vector<16x128xf32> to vector<2x8x128xf32>
    %cst = arith.constant dense<0.000000e+00> : vector<8x128xf32>
    %9 = vector.multi_reduction <add>, %8, %cst [0] : vector<2x8x128xf32> to vector<8x128xf32>
    %10 = arith.addf %7, %9 : vector<8x128xf32>
    %c0_6 = arith.constant 0 : index
    %c0_7 = arith.constant 0 : index
    %11 = vector.load %arg5[%c0_6, %c0_7] : memref<8x128xf32, #tpu.memory_space<vmem>>, vector<8x128xf32>
    tpu.vector_store %arg5[%c0_6, %c0_7], %10 {strides = array<i32>} : memref<8x128xf32, #tpu.memory_space<vmem>>, vector<8x128xf32>,
    %c0_i32_8 = arith.constant 0 : i32
    %12 = arith.cmpi eq, %arg1, %c0_i32_8 : i32
    %13 = arith.extui %12 : i1 to i32
    %c0_i32_9 = arith.constant 0 : i32
    %14 = arith.cmpi ne, %13, %c0_i32_9 : i32
    scf.if %14 {
      %c0_10 = arith.constant 0 : index
      %c0_11 = arith.constant 0 : index
      %15 = vector.load %arg5[%c0_10, %c0_11] : memref<8x128xf32, #tpu.memory_space<vmem>>, vector<8x128xf32>
      %16 = vector.shape_cast %15 : vector<8x128xf32> to vector<1x8x128xf32>
      %cst_12 = arith.constant dense<0.000000e+00> : vector<1xf32>
      %17 = vector.multi_reduction <add>, %16, %cst_12 [1, 2] : vector<1x8x128xf32> to vector<1xf32>
      %18 = vector.shape_cast %17 : vector<1xf32> to vector<1x1x1xf32>
      %19 = vector.extract %18[0, 0, 0] : f32 from vector<1x1x1xf32>
      %cst_13 = arith.constant 0.000000e+00 : f32
      %20 = vector.broadcast %cst_13 : f32 to vector<1x1xf32>
      %21 = vector.broadcast %19 : f32 to vector<1x1xf32>
      %22 = arith.addf %21, %20 : vector<1x1xf32>
      %c0_14 = arith.constant 0 : index
      %c0_15 = arith.constant 0 : index
      %23 = vector.load %arg4[%c0_14, %c0_15] : memref<1x1xf32, #tpu.memory_space<vmem>>, vector<1x1xf32>
      tpu.vector_store %arg4[%c0_14, %c0_15], %22 {strides = array<i32>} : memref<1x1xf32, #tpu.memory_space<vmem>>, vector<1x1xf32>,
    } else {
    }
    return
  }
  func.func @transform_0(%arg0: i32, %arg1: i32) -> (i32, i32) {
    %c1_i32 = arith.constant 1 : i32
    %0 = arith.muli %arg0, %c1_i32 : i32
    %1 = arith.addi %0, %arg1 : i32
    %c0_i32 = arith.constant 0 : i32
    %c0_i32_0 = arith.constant 0 : i32
    return %1, %c0_i32 : i32, i32
  }
  func.func @transform_1(%arg0: i32, %arg1: i32) -> (i32, i32) {
    %c1_i32 = arith.constant 1 : i32
    %0 = arith.muli %arg0, %c1_i32 : i32
    %1 = arith.addi %0, %arg1 : i32
    %c0_i32 = arith.constant 0 : i32
    %c0_i32_0 = arith.constant 0 : i32
    return %1, %c0_i32 : i32, i32
  }
  func.func @transform_2(%arg0: i32, %arg1: i32) -> (i32, i32) {
    %c0_i32 = arith.constant 0 : i32
    %c0_i32_0 = arith.constant 0 : i32
    return %arg0, %c0_i32 : i32, i32
  }
}

</mosaic_0001>

<llo_original>
// kernel: tpu_custom_call.1
$region0: #{tpu_custom_call.1}
  #allocation0 [shape = 'u32[]', space=smem, size = 0x4, offset = 0x4, fixed_abs, tag = 'smem constant byte address 0x4 - core index']
  #allocation1 [shape = 'u32[144,128]{1,0:T(1,128)}', space=vmem, size = 0x12000, scoped, tag = 'internal scratch']
  #allocation2 [shape = 'f32[8,128]{1,0:T(8,128)}', space=vmem, size = 0x1000, scoped, tag = 'scratch operand']
  %s0 = inlined_call_operand.hbm [shape: f32[16,128], index: 0, kind: input, shape index: {}]
  %s1 = inlined_call_operand.hbm [shape: f32[16,128], index: 1, kind: input, shape index: {}]
  %s2 = inlined_call_operand.hbm [shape: f32[1,1], index: 2, kind: output, shape index: {}]
  %s3 = sld [smem:[#allocation0]]
  $region34: #{tpu_custom_call.1} parent=0
    _
  %s5 = ssub.s32 1, %s3
  %s6 = scalar_select 0, %s5, %s3
  $region1: #{tpu_custom_call.1} parent=0
    #allocation3 [shape = 'u8[8192]{0}', space=vmem, size = 0x2000, scoped, tag = 'input window, operand 0, single buffered']
    #allocation4 [shape = 's32[1]{0}', space=sflag, size = 0x4, scoped, tag = 'scoped memory for tpu_custom_call.1']
    #allocation5 [shape = 's32[1]{0}', space=sflag, size = 0x4, scoped, tag = 'scoped memory for tpu_custom_call.1']
    #allocation6 [shape = 'u8[8192]{0}', space=vmem, size = 0x2000, scoped, tag = 'input window, operand 1, single buffered']
    #allocation7 [shape = 's32[1]{0}', space=sflag, size = 0x4, scoped, tag = 'scoped memory for tpu_custom_call.1']
    #allocation8 [shape = 'u8[512]{0}', space=vmem, size = 0x400, scoped, tag = 'output window, operand 0, single buffered']
    %7 = vsyncpa [#allocation4], 0
    %8 = vsyncpa [#allocation7], 0
    %9 = vsyncpa [#allocation5], 0
    // Predicated region
    $region2: #{tpu_custom_call.1} parent=1 // pred_check
      _
    $region3: #{tpu_custom_call.1} parent=1 // pred_check_branch
      %11 = sbr.rel (0) target = $region5
    $region4: #{tpu_custom_call.1} parent=1 // pred_region
      %s12 = sadd.s32 0, 0
      %s13 = smul.u32 2, %s12
      %s15 = ssub.s32 256, 256
      %16 = vsyncadd [#allocation4], %s15
      %s17 = smul.addr %s13, 128
      %s18 = scalar_lea.hbm %s0, %s17
      %s19 = sshll.u32 [#allocation3], 4
      %s20 = int_to_ptr.vmem [resolvable:$true] %s19
      %25 = dma.hbm_to_vmem [thread:$0]  %s18, 256, %s20, [#allocation4], 128, 128, 8
    $region5: #{tpu_custom_call.1} parent=1 // pred_fallthru
      _
    // Predicated region
    $region6: #{tpu_custom_call.1} parent=1 // pred_check
      _
    $region7: #{tpu_custom_call.1} parent=1 // pred_check_branch
      %27 = sbr.rel (0) target = $region9
    $region8: #{tpu_custom_call.1} parent=1 // pred_region
      %s28 = sadd.s32 0, 0
      %s29 = smul.u32 2, %s28
      %s31 = ssub.s32 256, 256
      %32 = vsyncadd [#allocation7], %s31
      %s33 = smul.addr %s29, 128
      %s34 = scalar_lea.hbm %s1, %s33
      %s35 = sshll.u32 [#allocation6], 4
      %s36 = int_to_ptr.vmem [resolvable:$true] %s35
      %41 = dma.hbm_to_vmem [thread:$0]  %s34, 256, %s36, [#allocation7], 128, 128, 8
    $region9: #{tpu_custom_call.1} parent=1 // pred_fallthru
      _
    // Predicated region
    $region10: #{tpu_custom_call.1} parent=1 // pred_check
      _
    $region11: #{tpu_custom_call.1} parent=1 // pred_check_branch
      %43 = sbr.rel (0) target = $region13
    $region12: #{tpu_custom_call.1} parent=1 // pred_region
      %44 = dma.done [#allocation4], 256
    $region13: #{tpu_custom_call.1} parent=1 // pred_fallthru
      _
    // Predicated region
    $region14: #{tpu_custom_call.1} parent=1 // pred_check
      _
    $region15: #{tpu_custom_call.1} parent=1 // pred_check_branch
      %46 = sbr.rel (0) target = $region17
    $region16: #{tpu_custom_call.1} parent=1 // pred_region
      %47 = dma.done [#allocation7], 256
    $region17: #{tpu_custom_call.1} parent=1 // pred_fallthru
      _
    %s48 = sadd.s32 0, 0
    %s49 = smul.u32 2, %s48
    %s50 = sadd.s32 0, 0
    %s51 = smul.u32 2, %s50
    %p52 = scmp.eq.s32.totalorder 0, 0
    // Predicated region
    $region18: #{tpu_custom_call.1} parent=1 // pred_check
      %p53 = pneg %p52
    $region19: #{tpu_custom_call.1} parent=1 // pred_check_branch
      %55 = sbr.rel (%p53) target = $region21
    $region20: #{tpu_custom_call.1} parent=1 // pred_region
      %56 = vst [vmem:[#allocation2] sm:$0xff] 0.0
    $region21: #{tpu_custom_call.1} parent=1 // pred_fallthru
      _
    %v57 = vld [vmem:[#allocation3] sm:$0xff]
    %v58 = vld [vmem:[#allocation3 + $0x8] sm:$0xff]
    %v59 = vld [vmem:[#allocation6] sm:$0xff]
    %v60 = vld [vmem:[#allocation6 + $0x8] sm:$0xff]
    %v61 = vsub.f32 %v57, %v59
    %v62 = vsub.f32 %v58, %v60
    %v63 = vmul.f32 %v61, %v61
    %v64 = vmul.f32 %v62, %v62
    %v65 = vld [vmem:[#allocation2] sm:$0xff]
    %v66 = vadd.f32 %v63, %v64
    %v67 = vadd.f32 %v65, %v66
    %68 = vst [vmem:[#allocation2] sm:$0xff] %v67
    // Predicated region
    $region22: #{tpu_custom_call.1} parent=1 // pred_check
      %p69 = pneg %p52
    $region23: #{tpu_custom_call.1} parent=1 // pred_check_branch
      %71 = sbr.rel (%p69) target = $region25
    $region24: #{tpu_custom_call.1} parent=1 // pred_region
      %v72 = vld [vmem:[#allocation2] sm:$0xff]
      %73 = vadd.xlane.f32.xlu0 %v72
      %v74 = vpop.xlane.xlu0 %73
      %v75 = vrot.slane %v74, 4
      %v76 = vadd.f32 %v74, %v75
      %v77 = vrot.slane %v76, 2
      %v78 = vadd.f32 %v76, %v77
      %v79 = vrot.slane %v78, 1
      %v80 = vadd.f32 %v78, %v79
      %s81 = vtos %v80
      %v82 = vstv %s81
      %v83 = vadd.f32 %v82, 0.0
      %vm84 = vcmask 0
      %85 = vst.msk [vmem:[#allocation8] sm:$0x1] %vm84, %v83
    $region25: #{tpu_custom_call.1} parent=1 // pred_fallthru
      _
    // Predicated region
    $region26: #{tpu_custom_call.1} parent=1 // pred_check
      _
    $region27: #{tpu_custom_call.1} parent=1 // pred_check_branch
      %87 = sbr.rel (0) target = $region29
    $region28: #{tpu_custom_call.1} parent=1 // pred_region
      %s89 = ssub.s32 16, 16
      %90 = vsyncadd [#allocation5], %s89
      %s92 = sshll.u32 [#allocation8], 4
      %s93 = int_to_ptr.vmem [resolvable:$true] %s92
      %95 = dma.vmem_to_hbm [thread:$0]  %s93, 16, %s2, [#allocation5]
    $region29: #{tpu_custom_call.1} parent=1 // pred_fallthru
      _
    // Predicated region
    $region30: #{tpu_custom_call.1} parent=1 // pred_check
      _
    $region31: #{tpu_custom_call.1} parent=1 // pred_check_branch
      %97 = sbr.rel (0) target = $region33
    $region32: #{tpu_custom_call.1} parent=1 // pred_region
      %98 = dma.done [#allocation5], 16
    $region33: #{tpu_custom_call.1} parent=1 // pred_fallthru
      _
    %99 = vsyncpa [#allocation4], 1
    %100 = vsyncpa [#allocation7], 1
    %101 = vsyncpa [#allocation5], 1

</llo_original>
